<compile_context>
chip_gen: v6e
topology: v6e:2x2x1
jax: 0.10.0
libtpu: 0.0.40
codegen_flags: <defaults>
</compile_context>

<pallas_src>
import math

import numpy as np
import jax
import jax.numpy as jnp
from jax.experimental import pallas as pl
from jax.experimental.pallas import tpu as pltpu


def _loss_kernel(pred_ref, tgt_ref, roww_ref, colw_ref, psum_ref, tsum_ref):
    roww = roww_ref[...]              # (TR, 1)  interior-row weights (0/1)
    colw = colw_ref[...]              # (1, Wp)  interior-col weights (0/1)

    def partial_sums(x_ref):
        x = x_ref[...].astype(jnp.float32)        # (TR, Wp)
        tr, wp = x.shape
        left = pltpu.roll(x, 1, axis=1)           # value of col j-1 at col j
        right = pltpu.roll(x, wp - 1, axis=1)     # value of col j+1 at col j
        up = pltpu.roll(x, 1, axis=0)             # value of row i-1 at row i
        down = pltpu.roll(x, tr - 1, axis=0)      # value of row i+1 at row i
        d = jnp.abs(2.0 * x - left - right) + jnp.abs(2.0 * x - up - down)
        d = d * roww * colw                       # zero borders / seams / wraps
        return jnp.sum(d, axis=0, keepdims=True)  # (1, Wp) per-lane partials

    psum_ref[0] = partial_sums(pred_ref)
    tsum_ref[0] = partial_sums(tgt_ref)


def experimental_loss_5(pred, target):
    assert pred.ndim == 4 and target.ndim == 4, "expected 4-dimensional data"
    assert pred.shape == target.shape, "inconsistent dimensions"
    B, C, H, W = pred.shape
    assert H > 2 and W > 2, "spatial dims must be > 2 for a second derivative"

    N = B * C
    inv_n = 1.0 / float(N * (H - 2) * (W - 2))

    # ---- lane packing: k planes side-by-side along the last (lane) axis ----
    k = max(1, -(-128 // W)) if W < 128 else 1
    Wp = k * W

    # ---- groups per grid block (per-input block target ~2 MiB of f32) ------
    # TODO(synk): for planes with H*Wp*4B >> budget, tile H with a halo instead.
    target_elems = 512 * 1024
    m = 8 // math.gcd(H, 8)                     # P_g multiple of m => TR % 8 == 0
    pg_budget = max(1, target_elems // (H * Wp))
    pg_budget = max(m, (pg_budget // m) * m)
    groups_needed = -(-N // k)
    groups_rounded = -(-groups_needed // m) * m
    P_g = min(pg_budget, groups_rounded)
    TR = P_g * H
    n_blocks = -(-groups_needed // P_g)
    N_pad = n_blocks * P_g * k                  # zero-padded plane count

    def pack(x):
        x = x.reshape(N, H, W)
        if N_pad != N:
            pad = jnp.zeros((N_pad - N, H, W), x.dtype)
            x = jnp.concatenate([x, pad], axis=0)
        # (groups, k, H, W) -> (groups, H, k, W) -> (groups*H, k*W)
        x = x.reshape(N_pad // k, k, H, W).transpose(0, 2, 1, 3)
        return x.reshape((N_pad // k) * H, Wp)

    p2 = pack(pred)
    t2 = pack(target)

    # Separable interior weights (border rows/cols of every plane -> 0).
    ri = np.arange(TR) % H
    ci = np.arange(Wp) % W
    roww = jnp.asarray(((ri >= 1) & (ri <= H - 2)).astype(np.float32).reshape(TR, 1))
    colw = jnp.asarray(((ci >= 1) & (ci <= W - 2)).astype(np.float32).reshape(1, Wp))

    out_shape = (
        jax.ShapeDtypeStruct((n_blocks, 1, Wp), jnp.float32),
        jax.ShapeDtypeStruct((n_blocks, 1, Wp), jnp.float32),
    )

    p_parts, t_parts = pl.pallas_call(
        _loss_kernel,
        out_shape=out_shape,
        grid_spec=pltpu.PrefetchScalarGridSpec(
            num_scalar_prefetch=0,
            grid=(n_blocks,),
            in_specs=[
                pl.BlockSpec((TR, Wp), lambda i: (i, 0)),
                pl.BlockSpec((TR, Wp), lambda i: (i, 0)),
                pl.BlockSpec((TR, 1), lambda i: (0, 0)),
                pl.BlockSpec((1, Wp), lambda i: (0, 0)),
            ],
            out_specs=[
                pl.BlockSpec((1, 1, Wp), lambda i: (i, 0, 0)),
                pl.BlockSpec((1, 1, Wp), lambda i: (i, 0, 0)),
            ],
        ),
        compiler_params=pltpu.CompilerParams(
            dimension_semantics=("parallel",),
            vmem_limit_bytes=48 * 1024 * 1024,
        ),
    )(p2, t2, roww, colw)

    # loss = mean(|d2| of target) - mean(|d2| of pred)
    return (jnp.sum(t_parts) - jnp.sum(p_parts)) * jnp.float32(inv_n)


def _reference_loss(pred, target):
    def sd_mean(x):
        c = x[:, :, 1:-1, 1:-1]
        h = 2.0 * c - x[:, :, 1:-1, :-2] - x[:, :, 1:-1, 2:]
        v = 2.0 * c - x[:, :, :-2, 1:-1] - x[:, :, 2:, 1:-1]
        return jnp.mean(jnp.abs(h) + jnp.abs(v))

    return sd_mean(target) - sd_mean(pred)


if __name__ == "__main__":
    key = jax.random.PRNGKey(0)

    # Primary test: shape consistent with the module's 4-D NCHW expectation.
    k_pred, k_tgt = jax.random.split(key)
    pred = jax.random.normal(k_pred, (2, 4, 16, 16), dtype=jnp.float32)
    target = jax.random.normal(k_tgt, (2, 4, 16, 16), dtype=jnp.float32)

    loss = experimental_loss_5(pred, target)
    jax.block_until_ready(loss)
    ref = _reference_loss(pred, target)
    assert jnp.allclose(loss, ref, atol=1e-5, rtol=1e-4), (loss, ref)

    # Secondary test: plane count not a multiple of the lane-pack factor
    # (exercises the zero-padding path).
    k_pred2, k_tgt2 = jax.random.split(jax.random.PRNGKey(1))
    pred2 = jax.random.normal(k_pred2, (2, 3, 16, 16), dtype=jnp.float32)
    target2 = jax.random.normal(k_tgt2, (2, 3, 16, 16), dtype=jnp.float32)

    loss2 = experimental_loss_5(pred2, target2)
    jax.block_until_ready(loss2)
    ref2 = _reference_loss(pred2, target2)
    assert jnp.allclose(loss2, ref2, atol=1e-5, rtol=1e-4), (loss2, ref2)

    print("KERNEL_OK")
</pallas_src>

<mosaic_0001>
module attributes {stable_mosaic.version = 11 : i64} {
  func.func @_loss_kernel(%arg0: i32, %arg1: memref<16x128xf32, #tpu.memory_space<vmem>>, %arg2: memref<16x128xf32, #tpu.memory_space<vmem>>, %arg3: memref<16x1xf32, #tpu.memory_space<vmem>>, %arg4: memref<1x128xf32, #tpu.memory_space<vmem>>, %arg5: memref<1x1x128xf32, #tpu.memory_space<vmem>>, %arg6: memref<1x1x128xf32, #tpu.memory_space<vmem>>) attributes {dimension_semantics = [#tpu.dimension_semantics<parallel>], iteration_bounds = array<i64: 1>, scalar_prefetch = 0 : i64, scratch_operands = 0 : i64, tpu.core_type = #tpu.core_type<tc>, window_params = [{transform_indices = @transform_0, window_bounds = array<i64: 16, 128>}, {transform_indices = @transform_1, window_bounds = array<i64: 16, 128>}, {pipeline_mode = #tpu.pipeline_mode<synchronous>, transform_indices = @transform_2, window_bounds = array<i64: 16, 1>}, {pipeline_mode = #tpu.pipeline_mode<synchronous>, transform_indices = @transform_3, window_bounds = array<i64: 1, 128>}, {transform_indices = @transform_4, window_bounds = array<i64: 1, 1, 128>}, {transform_indices = @transform_5, window_bounds = array<i64: 1, 1, 128>}]} {
    %c0 = arith.constant 0 : index
    %c0_0 = arith.constant 0 : index
    %0 = vector.load %arg3[%c0, %c0_0] : memref<16x1xf32, #tpu.memory_space<vmem>>, vector<16x1xf32>
    %c0_1 = arith.constant 0 : index
    %c0_2 = arith.constant 0 : index
    %1 = vector.load %arg4[%c0_1, %c0_2] : memref<1x128xf32, #tpu.memory_space<vmem>>, vector<1x128xf32>
    %c0_3 = arith.constant 0 : index
    %c0_4 = arith.constant 0 : index
    %2 = vector.load %arg1[%c0_3, %c0_4] : memref<16x128xf32, #tpu.memory_space<vmem>>, vector<16x128xf32>
    %c1_i32 = arith.constant 1 : i32
    %3 = tpu.dynamic_rotate %2 by %c1_i32 dim 1 : vector<16x128xf32>, i32 -> vector<16x128xf32>
    %c127_i32 = arith.constant 127 : i32
    %4 = tpu.dynamic_rotate %2 by %c127_i32 dim 1 : vector<16x128xf32>, i32 -> vector<16x128xf32>
    %c1_i32_5 = arith.constant 1 : i32
    %5 = tpu.dynamic_rotate %2 by %c1_i32_5 dim 0 : vector<16x128xf32>, i32 -> vector<16x128xf32>
    %c15_i32 = arith.constant 15 : i32
    %6 = tpu.dynamic_rotate %2 by %c15_i32 dim 0 : vector<16x128xf32>, i32 -> vector<16x128xf32>
    %cst = arith.constant 2.000000e+00 : f32
    %7 = vector.broadcast %cst : f32 to vector<16x128xf32>
    %8 = arith.mulf %7, %2 : vector<16x128xf32>
    %9 = arith.subf %8, %3 : vector<16x128xf32>
    %10 = arith.subf %9, %4 : vector<16x128xf32>
    %11 = math.absf %10 : vector<16x128xf32>
    %cst_6 = arith.constant 2.000000e+00 : f32
    %12 = vector.broadcast %cst_6 : f32 to vector<16x128xf32>
    %13 = arith.mulf %12, %2 : vector<16x128xf32>
    %14 = arith.subf %13, %5 : vector<16x128xf32>
    %15 = arith.subf %14, %6 : vector<16x128xf32>
    %16 = math.absf %15 : vector<16x128xf32>
    %17 = arith.addf %11, %16 : vector<16x128xf32>
    %18 = vector.broadcast %0 : vector<16x1xf32> to vector<16x128xf32>
    %19 = arith.mulf %17, %18 : vector<16x128xf32>
    %20 = vector.broadcast %1 : vector<1x128xf32> to vector<16x128xf32>
    %21 = arith.mulf %19, %20 : vector<16x128xf32>
    %cst_7 = arith.constant dense<0.000000e+00> : vector<128xf32>
    %22 = vector.multi_reduction <add>, %21, %cst_7 [0] : vector<16x128xf32> to vector<128xf32>
    %23 = vector.shape_cast %22 : vector<128xf32> to vector<1x128xf32>
    %c0_8 = arith.constant 0 : index
    %c0_9 = arith.constant 0 : index
    %c0_10 = arith.constant 0 : index
    %24 = vector.load %arg5[%c0_8, %c0_9, %c0_10] : memref<1x1x128xf32, #tpu.memory_space<vmem>>, vector<1x1x128xf32>
    %25 = vector.shape_cast %24 : vector<1x1x128xf32> to vector<1x128xf32>
    %26 = vector.shape_cast %23 : vector<1x128xf32> to vector<1x1x128xf32>
    tpu.vector_store %arg5[%c0_8, %c0_9, %c0_10], %26 {strides = array<i32>} : memref<1x1x128xf32, #tpu.memory_space<vmem>>, vector<1x1x128xf32>,
    %c0_11 = arith.constant 0 : index
    %c0_12 = arith.constant 0 : index
    %27 = vector.load %arg2[%c0_11, %c0_12] : memref<16x128xf32, #tpu.memory_space<vmem>>, vector<16x128xf32>
    %c1_i32_13 = arith.constant 1 : i32
    %28 = tpu.dynamic_rotate %27 by %c1_i32_13 dim 1 : vector<16x128xf32>, i32 -> vector<16x128xf32>
    %c127_i32_14 = arith.constant 127 : i32
    %29 = tpu.dynamic_rotate %27 by %c127_i32_14 dim 1 : vector<16x128xf32>, i32 -> vector<16x128xf32>
    %c1_i32_15 = arith.constant 1 : i32
    %30 = tpu.dynamic_rotate %27 by %c1_i32_15 dim 0 : vector<16x128xf32>, i32 -> vector<16x128xf32>
    %c15_i32_16 = arith.constant 15 : i32
    %31 = tpu.dynamic_rotate %27 by %c15_i32_16 dim 0 : vector<16x128xf32>, i32 -> vector<16x128xf32>
    %cst_17 = arith.constant 2.000000e+00 : f32
    %32 = vector.broadcast %cst_17 : f32 to vector<16x128xf32>
    %33 = arith.mulf %32, %27 : vector<16x128xf32>
    %34 = arith.subf %33, %28 : vector<16x128xf32>
    %35 = arith.subf %34, %29 : vector<16x128xf32>
    %36 = math.absf %35 : vector<16x128xf32>
    %cst_18 = arith.constant 2.000000e+00 : f32
    %37 = vector.broadcast %cst_18 : f32 to vector<16x128xf32>
    %38 = arith.mulf %37, %27 : vector<16x128xf32>
    %39 = arith.subf %38, %30 : vector<16x128xf32>
    %40 = arith.subf %39, %31 : vector<16x128xf32>
    %41 = math.absf %40 : vector<16x128xf32>
    %42 = arith.addf %36, %41 : vector<16x128xf32>
    %43 = vector.broadcast %0 : vector<16x1xf32> to vector<16x128xf32>
    %44 = arith.mulf %42, %43 : vector<16x128xf32>
    %45 = vector.broadcast %1 : vector<1x128xf32> to vector<16x128xf32>
    %46 = arith.mulf %44, %45 : vector<16x128xf32>
    %cst_19 = arith.constant dense<0.000000e+00> : vector<128xf32>
    %47 = vector.multi_reduction <add>, %46, %cst_19 [0] : vector<16x128xf32> to vector<128xf32>
    %48 = vector.shape_cast %47 : vector<128xf32> to vector<1x128xf32>
    %c0_20 = arith.constant 0 : index
    %c0_21 = arith.constant 0 : index
    %c0_22 = arith.constant 0 : index
    %49 = vector.load %arg6[%c0_20, %c0_21, %c0_22] : memref<1x1x128xf32, #tpu.memory_space<vmem>>, vector<1x1x128xf32>
    %50 = vector.shape_cast %49 : vector<1x1x128xf32> to vector<1x128xf32>
    %51 = vector.shape_cast %48 : vector<1x128xf32> to vector<1x1x128xf32>
    tpu.vector_store %arg6[%c0_20, %c0_21, %c0_22], %51 {strides = array<i32>} : memref<1x1x128xf32, #tpu.memory_space<vmem>>, vector<1x1x128xf32>,
    return
  }
  func.func @transform_0(%arg0: i32) -> (i32, i32) {
    %c0_i32 = arith.constant 0 : i32
    %c0_i32_0 = arith.constant 0 : i32
    return %arg0, %c0_i32 : i32, i32
  }
  func.func @transform_1(%arg0: i32) -> (i32, i32) {
    %c0_i32 = arith.constant 0 : i32
    %c0_i32_0 = arith.constant 0 : i32
    return %arg0, %c0_i32 : i32, i32
  }
  func.func @transform_2(%arg0: i32) -> (i32, i32) {
    %c0_i32 = arith.constant 0 : i32
    %c0_i32_0 = arith.constant 0 : i32
    %c0_i32_1 = arith.constant 0 : i32
    return %c0_i32, %c0_i32_0 : i32, i32
  }
  func.func @transform_3(%arg0: i32) -> (i32, i32) {
    %c0_i32 = arith.constant 0 : i32
    %c0_i32_0 = arith.constant 0 : i32
    %c0_i32_1 = arith.constant 0 : i32
    return %c0_i32, %c0_i32_0 : i32, i32
  }
  func.func @transform_4(%arg0: i32) -> (i32, i32, i32) {
    %c0_i32 = arith.constant 0 : i32
    %c0_i32_0 = arith.constant 0 : i32
    %c0_i32_1 = arith.constant 0 : i32
    return %arg0, %c0_i32, %c0_i32_0 : i32, i32, i32
  }
  func.func @transform_5(%arg0: i32) -> (i32, i32, i32) {
    %c0_i32 = arith.constant 0 : i32
    %c0_i32_0 = arith.constant 0 : i32
    %c0_i32_1 = arith.constant 0 : i32
    return %arg0, %c0_i32, %c0_i32_0 : i32, i32, i32
  }
}

</mosaic_0001>

<llo_original>
// kernel: tpu_custom_call.1
$region0: #{tpu_custom_call.1}
  #allocation0 [shape = 'u32[]', space=smem, size = 0x4, offset = 0x4, fixed_abs, tag = 'smem constant byte address 0x4 - core index']
  #allocation1 [shape = 'u32[144,128]{1,0:T(1,128)}', space=vmem, size = 0x12000, scoped, tag = 'internal scratch']
  %s0 = inlined_call_operand.vmem [shape: f32[16,128], index: 0, kind: input, shape index: {}]
  %s1 = inlined_call_operand.hbm [shape: f32[16,128], index: 1, kind: input, shape index: {}]
  %s2 = inlined_call_operand.vmem [shape: f32[16,1], index: 2, kind: input, shape index: {}]
  %s3 = inlined_call_operand.vmem [shape: f32[1,128], index: 3, kind: input, shape index: {}]
  %s4 = inlined_call_operand.hbm [shape: f32[1,1,128], index: 4, kind: output, shape index: {0}]
  %s5 = inlined_call_operand.hbm [shape: f32[1,1,128], index: 5, kind: output, shape index: {1}]
  %6 = xla_tuple %s4, %s5
  %s7 = sld [smem:[#allocation0]]
  $region38: #{tpu_custom_call.1} parent=0
    _
  %s9 = ssub.s32 1, %s7
  %s10 = scalar_select 0, %s9, %s7
  $region1: #{tpu_custom_call.1} parent=0
    #allocation2 [shape = 'u8[8192]{0}', space=vmem, size = 0x2000, scoped, tag = 'input window, operand 1, single buffered']
    #allocation3 [shape = 's32[1]{0}', space=sflag, size = 0x4, scoped, tag = 'scoped memory for tpu_custom_call.1']
    #allocation4 [shape = 's32[1]{0}', space=sflag, size = 0x4, scoped, tag = 'scoped memory for tpu_custom_call.1']
    #allocation5 [shape = 'u8[512]{0}', space=vmem, size = 0x400, scoped, tag = 'output window, operand 0, single buffered']
    #allocation6 [shape = 'u8[512]{0}', space=vmem, size = 0x400, scoped, tag = 'output window, operand 1, single buffered']
    #allocation7 [shape = 's32[1]{0}', space=sflag, size = 0x4, scoped, tag = 'scoped memory for tpu_custom_call.1']
    %11 = vsyncpa [#allocation3], 0
    %12 = vsyncpa [#allocation4], 0
    %13 = vsyncpa [#allocation7], 0
    // Predicated region
    $region2: #{tpu_custom_call.1} parent=1 // pred_check
      _
    $region3: #{tpu_custom_call.1} parent=1 // pred_check_branch
      %15 = sbr.rel (0) target = $region5
    $region4: #{tpu_custom_call.1} parent=1 // pred_region
      _
    $region5: #{tpu_custom_call.1} parent=1 // pred_fallthru
      _
    // Predicated region
    $region6: #{tpu_custom_call.1} parent=1 // pred_check
      _
    $region7: #{tpu_custom_call.1} parent=1 // pred_check_branch
      %17 = sbr.rel (0) target = $region9
    $region8: #{tpu_custom_call.1} parent=1 // pred_region
      %s19 = ssub.s32 256, 256
      %20 = vsyncadd [#allocation3], %s19
      %s21 = sshll.u32 [#allocation2], 4
      %s22 = int_to_ptr.vmem [resolvable:$true] %s21
      %27 = dma.hbm_to_vmem [thread:$0]  %s1, 256, %s22, [#allocation3], 128, 128, 8
    $region9: #{tpu_custom_call.1} parent=1 // pred_fallthru
      _
    // Predicated region
    $region10: #{tpu_custom_call.1} parent=1 // pred_check
      _
    $region11: #{tpu_custom_call.1} parent=1 // pred_check_branch
      %29 = sbr.rel (0) target = $region13
    $region12: #{tpu_custom_call.1} parent=1 // pred_region
      _
    $region13: #{tpu_custom_call.1} parent=1 // pred_fallthru
      _
    // Predicated region
    $region14: #{tpu_custom_call.1} parent=1 // pred_check
      _
    $region15: #{tpu_custom_call.1} parent=1 // pred_check_branch
      %31 = sbr.rel (0) target = $region17
    $region16: #{tpu_custom_call.1} parent=1 // pred_region
      _
    $region17: #{tpu_custom_call.1} parent=1 // pred_fallthru
      _
    // Predicated region
    $region18: #{tpu_custom_call.1} parent=1 // pred_check
      _
    $region19: #{tpu_custom_call.1} parent=1 // pred_check_branch
      %33 = sbr.rel (0) target = $region21
    $region20: #{tpu_custom_call.1} parent=1 // pred_region
      %34 = dma.done [#allocation3], 256
    $region21: #{tpu_custom_call.1} parent=1 // pred_fallthru
      _
    %v35 = vld [vmem:[%s2] sm:$0xff]
    %v36 = vld [vmem:[%s2 + $0x8] sm:$0xff]
    %v37 = vld [vmem:[%s3] sm:$0x1]
    %v38 = vld [vmem:[%s0] sm:$0xff]
    %v39 = vld [vmem:[%s0 + $0x8] sm:$0xff]
    %40 = vrot.lane.b32.xlu0 %v38, 1
    %v41 = vpop.permute.xlu0 %40
    %42 = vrot.lane.b32.xlu0 %v39, 1
    %v43 = vpop.permute.xlu0 %42
    %44 = vrot.lane.b32.xlu0 %v38, 127
    %v45 = vpop.permute.xlu0 %44
    %46 = vrot.lane.b32.xlu0 %v39, 127
    %v47 = vpop.permute.xlu0 %46
    %v48 = vrot.slane %v38, 7
    %v49 = vrot.slane %v39, 7
    %v50 = vlaneseq
    %v51 = vshrl.u32 %v50, 7
    %vm52 = vcmp.lt.s32.totalorder %v51, 1
    %v53 = vsel %vm52, %v48, %v49
    %v54 = vsel %vm52, %v49, %v48
    %v55 = vrot.slane %v38, 1
    %v56 = vrot.slane %v39, 1
    %vm57 = vcmp.lt.s32.totalorder %v51, 7
    %v58 = vsel %vm57, %v55, %v56
    %v59 = vsel %vm57, %v56, %v55
    %v60 = vmul.f32 %v38, 2.0
    %v61 = vmul.f32 %v39, 2.0
    %v62 = vsub.f32 %v60, %v41
    %v63 = vsub.f32 %v61, %v43
    %v64 = vsub.f32 %v62, %v45
    %v65 = vsub.f32 %v63, %v47
    %v66 = vand.u32 2147483647, %v64
    %v67 = vand.u32 2147483647, %v65
    %v68 = vsub.f32 %v60, %v54
    %v69 = vsub.f32 %v61, %v53
    %v70 = vsub.f32 %v68, %v58
    %v71 = vsub.f32 %v69, %v59
    %v72 = vand.u32 2147483647, %v70
    %v73 = vand.u32 2147483647, %v71
    %v74 = vadd.f32 %v66, %v72
    %v75 = vadd.f32 %v67, %v73
    %77 = vset.pattern.permute.xlu0 0
    %78 = vperm.xlu0 %77, %v35
    %v79 = vpop.permute.xlu0 %78
    %82 = vset.pattern.permute.xlu0 0
    %83 = vperm.xlu0 %82, %v36
    %v84 = vpop.permute.xlu0 %83
    %v86 = vmul.f32 %v74, %v79
    %v87 = vmul.f32 %v75, %v84
    %v89 = vlaneseq
    %v90 = vshrl.u32 %v89, 7
    %v91 = vsub.s32 0, %v90
    %v92 = vrot.slane %v37, %v91
    %v94 = vmul.f32 %v86, %v92
    %v95 = vmul.f32 %v87, %v92
    %v96 = vadd.f32 %v94, %v95
    %v97 = vrot.slane %v96, 4
    %v98 = vadd.f32 %v96, %v97
    %v99 = vrot.slane %v98, 2
    %v100 = vadd.f32 %v98, %v99
    %v101 = vrot.slane %v100, 1
    %v102 = vadd.f32 %v100, %v101
    %103 = vst [vmem:[#allocation5] sm:$0x1] %v102
    %v104 = vld [vmem:[#allocation2] sm:$0xff]
    %v105 = vld [vmem:[#allocation2 + $0x8] sm:$0xff]
    %106 = vrot.lane.b32.xlu0 %v104, 1
    %v107 = vpop.permute.xlu0 %106
    %108 = vrot.lane.b32.xlu0 %v105, 1
    %v109 = vpop.permute.xlu0 %108
    %110 = vrot.lane.b32.xlu0 %v104, 127
    %v111 = vpop.permute.xlu0 %110
    %112 = vrot.lane.b32.xlu0 %v105, 127
    %v113 = vpop.permute.xlu0 %112
    %v114 = vrot.slane %v104, 7
    %v115 = vrot.slane %v105, 7
    %v116 = vsel %vm52, %v114, %v115
    %v117 = vsel %vm52, %v115, %v114
    %v118 = vrot.slane %v104, 1
    %v119 = vrot.slane %v105, 1
    %v120 = vsel %vm57, %v118, %v119
    %v121 = vsel %vm57, %v119, %v118
    %v122 = vmul.f32 %v104, 2.0
    %v123 = vmul.f32 %v105, 2.0
    %v124 = vsub.f32 %v122, %v107
    %v125 = vsub.f32 %v123, %v109
    %v126 = vsub.f32 %v124, %v111
    %v127 = vsub.f32 %v125, %v113
    %v128 = vand.u32 2147483647, %v126
    %v129 = vand.u32 2147483647, %v127
    %v130 = vsub.f32 %v122, %v117
    %v131 = vsub.f32 %v123, %v116
    %v132 = vsub.f32 %v130, %v120
    %v133 = vsub.f32 %v131, %v121
    %v134 = vand.u32 2147483647, %v132
    %v135 = vand.u32 2147483647, %v133
    %v136 = vadd.f32 %v128, %v134
    %v137 = vadd.f32 %v129, %v135
    %v138 = vmul.f32 %v136, %v79
    %v139 = vmul.f32 %v137, %v84
    %v140 = vmul.f32 %v138, %v92
    %v141 = vmul.f32 %v139, %v92
    %v142 = vadd.f32 %v140, %v141
    %v143 = vrot.slane %v142, 4
    %v144 = vadd.f32 %v142, %v143
    %v145 = vrot.slane %v144, 2
    %v146 = vadd.f32 %v144, %v145
    %v147 = vrot.slane %v146, 1
    %v148 = vadd.f32 %v146, %v147
    %149 = vst [vmem:[#allocation6] sm:$0x1] %v148
    // Predicated region
    $region22: #{tpu_custom_call.1} parent=1 // pred_check
      _
    $region23: #{tpu_custom_call.1} parent=1 // pred_check_branch
      %151 = sbr.rel (0) target = $region25
    $region24: #{tpu_custom_call.1} parent=1 // pred_region
      %s153 = ssub.s32 16, 16
      %154 = vsyncadd [#allocation4], %s153
      %s156 = sshll.u32 [#allocation5], 4
      %s157 = int_to_ptr.vmem [resolvable:$true] %s156
      %159 = dma.vmem_to_hbm [thread:$0]  %s157, 16, %s4, [#allocation4]
    $region25: #{tpu_custom_call.1} parent=1 // pred_fallthru
      _
    // Predicated region
    $region26: #{tpu_custom_call.1} parent=1 // pred_check
      _
    $region27: #{tpu_custom_call.1} parent=1 // pred_check_branch
      %161 = sbr.rel (0) target = $region29
    $region28: #{tpu_custom_call.1} parent=1 // pred_region
      %s163 = ssub.s32 16, 16
      %164 = vsyncadd [#allocation7], %s163
      %s166 = sshll.u32 [#allocation6], 4
      %s167 = int_to_ptr.vmem [resolvable:$true] %s166
      %169 = dma.vmem_to_hbm [thread:$0]  %s167, 16, %s5, [#allocation7]
    $region29: #{tpu_custom_call.1} parent=1 // pred_fallthru
      _
    // Predicated region
    $region30: #{tpu_custom_call.1} parent=1 // pred_check
      _
    $region31: #{tpu_custom_call.1} parent=1 // pred_check_branch
      %171 = sbr.rel (0) target = $region33
    $region32: #{tpu_custom_call.1} parent=1 // pred_region
      %172 = dma.done [#allocation4], 16
    $region33: #{tpu_custom_call.1} parent=1 // pred_fallthru
      _
    // Predicated region
    $region34: #{tpu_custom_call.1} parent=1 // pred_check
      _
    $region35: #{tpu_custom_call.1} parent=1 // pred_check_branch
      %174 = sbr.rel (0) target = $region37
    $region36: #{tpu_custom_call.1} parent=1 // pred_region
      %175 = dma.done [#allocation7], 16
    $region37: #{tpu_custom_call.1} parent=1 // pred_fallthru
      _
    %176 = vsyncpa [#allocation3], 1
    %177 = vsyncpa [#allocation4], 1
    %178 = vsyncpa [#allocation7], 1

</llo_original>
